<compile_context>
chip_gen: v7x
topology: tpu7x:2x2x1
jax: 0.10.0
libtpu: 0.0.40
codegen_flags: <defaults>
</compile_context>

<pallas_src>
import math

import jax
import jax.numpy as jnp
from jax.experimental import pallas as pl
from jax.experimental.pallas import tpu as pltpu


def _cmvn_var_kernel(x_ref, stats_ref, o_ref):
    # x_ref: (tile, lane); stats_ref: (2, lane) = [mean; istd]
    x = x_ref[...].astype(jnp.float32)
    mean = stats_ref[0:1, :]
    istd = stats_ref[1:2, :]
    o_ref[...] = ((x - mean) * istd).astype(o_ref.dtype)


def _cmvn_novar_kernel(x_ref, stats_ref, o_ref):
    # x_ref: (tile, lane); stats_ref: (1, lane) = [mean]
    x = x_ref[...].astype(jnp.float32)
    o_ref[...] = (x - stats_ref[0:1, :]).astype(o_ref.dtype)


def _vmem_budget_bytes() -> int:
    """Byte budget for the 4 live blocks (in+out, double-buffered)."""
    try:
        kind = jax.devices()[0].device_kind.lower()
    except Exception:  # pragma: no cover - defensive
        kind = ""
    if "v7" in kind:
        return 24 << 20  # 64 MiB physical / 32 MiB default scoped: headroom
    if "v6" in kind:
        return 24 << 20  # 128 MiB physical / 32 MiB default scoped
    return 12 << 20      # v5e & unknown: stay under the 16 MiB default scoped


def _sublane_multiple(dtype) -> int:
    itemsize = jnp.dtype(dtype).itemsize
    return {4: 8, 2: 16, 1: 32}.get(itemsize, 8)


def global_cmvn(x, mean, istd, norm_var: bool = True, *,
                max_lane: int = 2560, donate_input: bool = False):
    """Pallas equivalent of GlobalCMVN.forward.

    Args:
      x:    (batch, max_len, feat_dim)
      mean: (feat_dim,) mean stats
      istd: (feat_dim,) inverse std (1.0 / std)
      norm_var: whether to multiply by istd (static flag).
      max_lane: cap for the lane-dense lcm(F, 128) trick.
      donate_input: alias x's flattened buffer to the output (caller donates x).
    Returns:
      normalized x, same shape/dtype as x.
    """
    B, T, F = x.shape
    assert mean.shape == (F,) and istd.shape == (F,)
    total_rows = B * T

    x_flat = x.reshape(total_rows, F)
    mean_f32 = mean.astype(jnp.float32)
    istd_f32 = istd.astype(jnp.float32)

    L = math.lcm(F, 128)
    if L <= max_lane:
        # Lane-dense view of width lcm(F, 128).  Pad (< reps) rows if B*T is
        # not a multiple of reps so stores stay unmasked.
        reps = L // F
        row_pad = (-total_rows) % reps
        if row_pad:
            # TODO(synk): wrapper-side pad materializes a copy of x; a tiny
            # remainder-only second kernel would avoid it for huge inputs.
            x_flat = jnp.pad(x_flat, ((0, row_pad), (0, 0)))
        lane = L
        rows = (total_rows + row_pad) // reps
        x2 = x_flat.reshape(rows, lane)
        mean_lane = jnp.tile(mean_f32, reps)
        istd_lane = jnp.tile(istd_f32, reps)
        col_pad = 0
    else:
        # Huge lcm (e.g. F odd / coprime with 128): pad the feature dim to the
        # next multiple of 128 so blocks stay small and stores unmasked.
        lane = ((F + 127) // 128) * 128
        col_pad = lane - F
        row_pad = 0
        rows = total_rows
        if col_pad:
            x_flat = jnp.pad(x_flat, ((0, 0), (0, col_pad)))
        x2 = x_flat
        mean_lane = jnp.pad(mean_f32, (0, col_pad))
        istd_lane = jnp.pad(istd_f32, (0, col_pad), constant_values=1.0)

    # Stats in float32; istd only shipped when norm_var (no dead DMA).
    if norm_var:
        stats = jnp.stack([mean_lane, istd_lane], axis=0)      # (2, lane)
        kernel = _cmvn_var_kernel
    else:
        stats = mean_lane.reshape(1, lane)                      # (1, lane)
        kernel = _cmvn_novar_kernel

    # ---- Row-tile selection: per-generation VMEM budget, sublane-aligned,
    # ---- >=2 near-equal (preferably even) grid steps for v7x megacore.
    itemsize = jnp.dtype(x.dtype).itemsize
    sub = _sublane_multiple(x.dtype)

    if rows <= 2 * sub:
        # Tiny input: single full-extent block (block dim == array dim is legal).
        tile = rows
        grid = (1,)
    else:
        budget = _vmem_budget_bytes()
        # in + out blocks, each double-buffered -> 4 live blocks of tile*lane.
        max_tile = max(sub, budget // (4 * lane * itemsize))
        n_steps = max(2, pl.cdiv(rows, max_tile))
        if n_steps % 2:
            n_steps += 1                      # even split across 2 TCs (v7x)
        tile = pl.cdiv(rows, n_steps)
        tile = max(sub, ((tile + sub - 1) // sub) * sub)
        grid = (pl.cdiv(rows, tile),)

    n_elem = rows * lane
    cost = pl.CostEstimate(
        flops=(2 if norm_var else 1) * n_elem,
        transcendentals=0,
        bytes_accessed=2 * n_elem * itemsize + int(stats.size) * 4,
    )

    out2 = pl.pallas_call(
        kernel,
        out_shape=jax.ShapeDtypeStruct((rows, lane), x.dtype),
        grid_spec=pltpu.PrefetchScalarGridSpec(
            num_scalar_prefetch=0,
            grid=grid,
            in_specs=[
                pl.BlockSpec((tile, lane), lambda r: (r, 0)),
                pl.BlockSpec((stats.shape[0], lane), lambda r: (0, 0)),
            ],
            out_specs=pl.BlockSpec((tile, lane), lambda r: (r, 0)),
        ),
        compiler_params=pltpu.CompilerParams(
            dimension_semantics=("parallel",),
        ),
        cost_estimate=cost,
        input_output_aliases=({0: 0} if donate_input else {}),
    )(x2, stats)

    # ---- Undo the wrapper-side padding / reshaping.
    if col_pad:
        out_flat = out2[:, :F]
    else:
        out_flat = out2.reshape(total_rows + row_pad, F)
        if row_pad:
            out_flat = out_flat[:total_rows]
    return out_flat.reshape(B, T, F)


if __name__ == "__main__":
    key = jax.random.PRNGKey(0)
    kx, km, ks = jax.random.split(key, 3)

    feat_dim = 80  # typical speech feature dim (< 128)
    mean = jax.random.normal(km, (feat_dim,), dtype=jnp.float32)
    std = jax.random.uniform(ks, (feat_dim,), dtype=jnp.float32,
                             minval=0.5, maxval=2.0)
    istd = 1.0 / std

    def ref_fn(x, m, s, norm_var=True):
        y = x.astype(jnp.float32) - m[None, None, :]
        if norm_var:
            y = y * s[None, None, :]
        return y.astype(x.dtype)

    # 1) norm_var=True, divisible case (lane-dense lcm(80,128)=640).
    x = jax.random.normal(kx, (2, 8, feat_dim), dtype=jnp.float32)
    out = jax.block_until_ready(global_cmvn(x, mean, istd, norm_var=True))
    assert out.shape == x.shape and out.dtype == x.dtype
    assert jnp.allclose(out, ref_fn(x, mean, istd, True), atol=1e-6, rtol=1e-6)

    # 2) norm_var=False path (mean-only stats input).
    out2 = jax.block_until_ready(global_cmvn(x, mean, istd, norm_var=False))
    assert jnp.allclose(out2, ref_fn(x, mean, istd, False), atol=1e-6, rtol=1e-6)

    # 3) Row-pad path: B*T not a multiple of lcm(F,128)/F.
    x3 = jax.random.normal(kx, (1, 3, feat_dim), dtype=jnp.float32)
    out3 = jax.block_until_ready(global_cmvn(x3, mean, istd, norm_var=True))
    assert jnp.allclose(out3, ref_fn(x3, mean, istd, True), atol=1e-6, rtol=1e-6)

    # 4) Column-pad path: F=81 (huge lcm with 128) -> pad feature dim to 128.
    f2 = 81
    mean81 = jax.random.normal(km, (f2,), dtype=jnp.float32)
    istd81 = 1.0 / jax.random.uniform(ks, (f2,), dtype=jnp.float32,
                                      minval=0.5, maxval=2.0)
    x4 = jax.random.normal(kx, (2, 13, f2), dtype=jnp.float32)
    out4 = jax.block_until_ready(global_cmvn(x4, mean81, istd81, norm_var=True))
    assert jnp.allclose(out4, ref_fn(x4, mean81, istd81, True),
                        atol=1e-6, rtol=1e-6)

    # 5) bf16 input (f32 stats math in-kernel, cast at the final store).
    x5 = jax.random.normal(kx, (2, 40, feat_dim), dtype=jnp.bfloat16)
    out5 = jax.block_until_ready(global_cmvn(x5, mean, istd, norm_var=True))
    assert out5.dtype == jnp.bfloat16
    assert jnp.allclose(out5.astype(jnp.float32),
                        ref_fn(x5, mean, istd, True).astype(jnp.float32),
                        atol=1e-2, rtol=1e-2)

    print("KERNEL_OK")
</pallas_src>

<mosaic_0001>
module attributes {stable_mosaic.version = 11 : i64} {
  func.func @_cmvn_var_kernel(%arg0: i32, %arg1: memref<2x640xf32, #tpu.memory_space<vmem>>, %arg2: memref<2x640xf32, #tpu.memory_space<vmem>>, %arg3: memref<2x640xf32, #tpu.memory_space<vmem>>) attributes {dimension_semantics = [#tpu.dimension_semantics<parallel>], iteration_bounds = array<i64: 1>, scalar_prefetch = 0 : i64, scratch_operands = 0 : i64, tpu.core_type = #tpu.core_type<tc>, window_params = [{transform_indices = @transform_0, window_bounds = array<i64: 2, 640>}, {pipeline_mode = #tpu.pipeline_mode<synchronous>, transform_indices = @transform_1, window_bounds = array<i64: 2, 640>}, {transform_indices = @transform_2, window_bounds = array<i64: 2, 640>}]} {
    %c0 = arith.constant 0 : index
    %c0_0 = arith.constant 0 : index
    %0 = vector.load %arg1[%c0, %c0_0] : memref<2x640xf32, #tpu.memory_space<vmem>>, vector<2x640xf32>
    %c0_1 = arith.constant 0 : index
    %c0_2 = arith.constant 0 : index
    %1 = vector.load %arg2[%c0_1, %c0_2] : memref<2x640xf32, #tpu.memory_space<vmem>>, vector<1x640xf32>
    %c1 = arith.constant 1 : index
    %c0_3 = arith.constant 0 : index
    %2 = vector.load %arg2[%c1, %c0_3] : memref<2x640xf32, #tpu.memory_space<vmem>>, vector<1x640xf32>
    %3 = vector.broadcast %1 : vector<1x640xf32> to vector<2x640xf32>
    %4 = arith.subf %0, %3 : vector<2x640xf32>
    %5 = vector.broadcast %2 : vector<1x640xf32> to vector<2x640xf32>
    %6 = arith.mulf %4, %5 : vector<2x640xf32>
    %c0_4 = arith.constant 0 : index
    %c0_5 = arith.constant 0 : index
    %7 = vector.load %arg3[%c0_4, %c0_5] : memref<2x640xf32, #tpu.memory_space<vmem>>, vector<2x640xf32>
    tpu.vector_store %arg3[%c0_4, %c0_5], %6 {strides = array<i32>} : memref<2x640xf32, #tpu.memory_space<vmem>>, vector<2x640xf32>,
    return
  }
  func.func @transform_0(%arg0: i32) -> (i32, i32) {
    %c0_i32 = arith.constant 0 : i32
    %c0_i32_0 = arith.constant 0 : i32
    return %arg0, %c0_i32 : i32, i32
  }
  func.func @transform_1(%arg0: i32) -> (i32, i32) {
    %c0_i32 = arith.constant 0 : i32
    %c0_i32_0 = arith.constant 0 : i32
    %c0_i32_1 = arith.constant 0 : i32
    return %c0_i32, %c0_i32_0 : i32, i32
  }
  func.func @transform_2(%arg0: i32) -> (i32, i32) {
    %c0_i32 = arith.constant 0 : i32
    %c0_i32_0 = arith.constant 0 : i32
    return %arg0, %c0_i32 : i32, i32
  }
}

</mosaic_0001>

<llo_original>
// kernel: tpu_custom_call.1
$region0: #{tpu_custom_call.1}
  #allocation0 [shape = 'u32[]', space=smem, size = 0x4, offset = 0x4, fixed_abs, tag = 'smem constant byte address 0x4 - core index']
  #allocation1 [shape = 'u32[144,128]{1,0:T(1,128)}', space=vmem, size = 0x12000, scoped, tag = 'internal scratch']
  %s0 = inlined_call_operand.hbm [shape: f32[2,640], index: 0, kind: input, shape index: {}]
  %s1 = inlined_call_operand.hbm [shape: f32[2,640], index: 1, kind: input, shape index: {}]
  %s2 = inlined_call_operand.hbm [shape: f32[2,640], index: 2, kind: output, shape index: {}]
  %s3 = sld [smem:[#allocation0]]
  $region26: #{tpu_custom_call.1} parent=0
    _
  %s5 = ssub.s32 1, %s3
  %s6 = scalar_select 0, %s5, %s3
  $region1: #{tpu_custom_call.1} parent=0
    #allocation2 [shape = 'u8[5120]{0}', space=vmem, size = 0x1400, scoped, tag = 'input window, operand 0, single buffered']
    #allocation3 [shape = 's32[1]{0}', space=sflag, size = 0x4, scoped, tag = 'scoped memory for tpu_custom_call.1']
    #allocation4 [shape = 's32[1]{0}', space=sflag, size = 0x4, scoped, tag = 'scoped memory for tpu_custom_call.1']
    #allocation5 [shape = 'u8[5120]{0}', space=vmem, size = 0x1400, scoped, tag = 'input window, operand 1, single buffered']
    #allocation6 [shape = 's32[1]{0}', space=sflag, size = 0x4, scoped, tag = 'scoped memory for tpu_custom_call.1']
    #allocation7 [shape = 'u8[5120]{0}', space=vmem, size = 0x1400, scoped, tag = 'output window, operand 0, single buffered']
    %7 = vsyncpa [#allocation3], 0
    %8 = vsyncpa [#allocation6], 0
    %9 = vsyncpa [#allocation4], 0
    // Predicated region
    $region2: #{tpu_custom_call.1} parent=1 // pred_check
      _
    $region3: #{tpu_custom_call.1} parent=1 // pred_check_branch
      %11 = sbr.rel (0) target = $region5
    $region4: #{tpu_custom_call.1} parent=1 // pred_region
      %s13 = ssub.s32 160, 160
      %14 = vsyncadd [#allocation3], %s13
      %s16 = sshll.u32 [#allocation2], 4
      %s17 = int_to_ptr.vmem [resolvable:$true] %s16
      %19 = dma.hbm_to_vmem [thread:$0]  %s0, 160, %s17, [#allocation3]
    $region5: #{tpu_custom_call.1} parent=1 // pred_fallthru
      _
    // Predicated region
    $region6: #{tpu_custom_call.1} parent=1 // pred_check
      _
    $region7: #{tpu_custom_call.1} parent=1 // pred_check_branch
      %21 = sbr.rel (0) target = $region9
    $region8: #{tpu_custom_call.1} parent=1 // pred_region
      %s23 = ssub.s32 160, 160
      %24 = vsyncadd [#allocation6], %s23
      %s26 = sshll.u32 [#allocation5], 4
      %s27 = int_to_ptr.vmem [resolvable:$true] %s26
      %29 = dma.hbm_to_vmem [thread:$0]  %s1, 160, %s27, [#allocation6]
    $region9: #{tpu_custom_call.1} parent=1 // pred_fallthru
      _
    // Predicated region
    $region10: #{tpu_custom_call.1} parent=1 // pred_check
      _
    $region11: #{tpu_custom_call.1} parent=1 // pred_check_branch
      %31 = sbr.rel (0) target = $region13
    $region12: #{tpu_custom_call.1} parent=1 // pred_region
      %32 = dma.done [#allocation3], 160
    $region13: #{tpu_custom_call.1} parent=1 // pred_fallthru
      _
    // Predicated region
    $region14: #{tpu_custom_call.1} parent=1 // pred_check
      _
    $region15: #{tpu_custom_call.1} parent=1 // pred_check_branch
      %34 = sbr.rel (0) target = $region17
    $region16: #{tpu_custom_call.1} parent=1 // pred_region
      %35 = dma.done [#allocation6], 160
    $region17: #{tpu_custom_call.1} parent=1 // pred_fallthru
      _
    %v36 = vld [vmem:[#allocation2] sm:$0xff]
    %v37 = vld [vmem:[#allocation2 + $0x8] sm:$0x3]
    %v38 = vld [vmem:[#allocation5] ss:$2 sm:$0x1f]
    %s39 = scalar_lea.vmem [#allocation5], 1
    %v40 = vld [vmem:[%s39] ss:$2 sm:$0x1f]
    %v42 = vlaneseq
    %v43 = vshrl.u32 %v42, 7
    %v44 = vsub.s32 0, %v43
    %v45 = vrot.slane %v38, %v44
    %v46 = vlaneseq
    %v47 = vshrl.u32 %v46, 7
    %v48 = vsub.s32 1, %v47
    %v49 = vrot.slane %v38, %v48
    %v50 = vlaneseq
    %v51 = vshrl.u32 %v50, 7
    %v52 = vsub.s32 2, %v51
    %v53 = vrot.slane %v38, %v52
    %v54 = vlaneseq
    %v55 = vshrl.u32 %v54, 7
    %v56 = vsub.s32 3, %v55
    %v57 = vrot.slane %v38, %v56
    %v58 = vlaneseq
    %v59 = vshrl.u32 %v58, 7
    %v60 = vsub.s32 4, %v59
    %v61 = vrot.slane %v38, %v60
    %v62 = vcombine.low %v45, %v49
    %v63 = vcombine.low %v53, %v57
    %v65 = vunpack.c.l.s4 1983009808
    %v66 = vunpack.c.0.s8 %v65
    %v67 = vlaneseq
    %v68 = vshrl.u32 %v67, 7
    %v69 = vsub.s32 %v66, %v68
    %v70 = vrot.slane %v62, %v69
    %v72 = vunpack.c.l.s4 1983009808
    %v73 = vunpack.c.0.s8 %v72
    %v74 = vlaneseq
    %v75 = vshrl.u32 %v74, 7
    %v76 = vsub.s32 %v73, %v75
    %v77 = vrot.slane %v63, %v76
    %v78 = vcombine.low %v70, %v77
    %v80 = vunpack.c.l.s4 1983009808
    %v81 = vunpack.c.0.s8 %v80
    %v82 = vlaneseq
    %v83 = vshrl.u32 %v82, 7
    %v84 = vsub.s32 %v81, %v83
    %v85 = vrot.slane %v61, %v84
    %v88 = vsub.f32 %v36, %v78
    %v89 = vsub.f32 %v37, %v85
    %v91 = vlaneseq
    %v92 = vshrl.u32 %v91, 7
    %v93 = vsub.s32 0, %v92
    %v94 = vrot.slane %v40, %v93
    %v95 = vlaneseq
    %v96 = vshrl.u32 %v95, 7
    %v97 = vsub.s32 1, %v96
    %v98 = vrot.slane %v40, %v97
    %v99 = vlaneseq
    %v100 = vshrl.u32 %v99, 7
    %v101 = vsub.s32 2, %v100
    %v102 = vrot.slane %v40, %v101
    %v103 = vlaneseq
    %v104 = vshrl.u32 %v103, 7
    %v105 = vsub.s32 3, %v104
    %v106 = vrot.slane %v40, %v105
    %v107 = vlaneseq
    %v108 = vshrl.u32 %v107, 7
    %v109 = vsub.s32 4, %v108
    %v110 = vrot.slane %v40, %v109
    %v111 = vcombine.low %v94, %v98
    %v112 = vcombine.low %v102, %v106
    %v114 = vunpack.c.l.s4 1983009808
    %v115 = vunpack.c.0.s8 %v114
    %v116 = vlaneseq
    %v117 = vshrl.u32 %v116, 7
    %v118 = vsub.s32 %v115, %v117
    %v119 = vrot.slane %v111, %v118
    %v121 = vunpack.c.l.s4 1983009808
    %v122 = vunpack.c.0.s8 %v121
    %v123 = vlaneseq
    %v124 = vshrl.u32 %v123, 7
    %v125 = vsub.s32 %v122, %v124
    %v126 = vrot.slane %v112, %v125
    %v127 = vcombine.low %v119, %v126
    %v129 = vunpack.c.l.s4 1983009808
    %v130 = vunpack.c.0.s8 %v129
    %v131 = vlaneseq
    %v132 = vshrl.u32 %v131, 7
    %v133 = vsub.s32 %v130, %v132
    %v134 = vrot.slane %v110, %v133
    %v137 = vmul.f32 %v88, %v127
    %v138 = vmul.f32 %v89, %v134
    %139 = vst [vmem:[#allocation7] sm:$0xff] %v137
    %140 = vst [vmem:[#allocation7 + $0x8] sm:$0x3] %v138
    // Predicated region
    $region18: #{tpu_custom_call.1} parent=1 // pred_check
      _
    $region19: #{tpu_custom_call.1} parent=1 // pred_check_branch
      %142 = sbr.rel (0) target = $region21
    $region20: #{tpu_custom_call.1} parent=1 // pred_region
      %s144 = ssub.s32 160, 160
      %145 = vsyncadd [#allocation4], %s144
      %s147 = sshll.u32 [#allocation7], 4
      %s148 = int_to_ptr.vmem [resolvable:$true] %s147
      %150 = dma.vmem_to_hbm [thread:$0]  %s148, 160, %s2, [#allocation4]
    $region21: #{tpu_custom_call.1} parent=1 // pred_fallthru
      _
    // Predicated region
    $region22: #{tpu_custom_call.1} parent=1 // pred_check
      _
    $region23: #{tpu_custom_call.1} parent=1 // pred_check_branch
      %152 = sbr.rel (0) target = $region25
    $region24: #{tpu_custom_call.1} parent=1 // pred_region
      %153 = dma.done [#allocation4], 160
    $region25: #{tpu_custom_call.1} parent=1 // pred_fallthru
      _
    %154 = vsyncpa [#allocation3], 1
    %155 = vsyncpa [#allocation6], 1
    %156 = vsyncpa [#allocation4], 1

</llo_original>
